<compile_context>
chip_gen: v7x
topology: tpu7x:2x2x1
jax: 0.10.0
libtpu: 0.0.40
codegen_flags: <defaults>
</compile_context>

<pallas_src>
import jax
import jax.numpy as jnp
from jax.experimental import pallas as pl
from jax.experimental.pallas import tpu as pltpu


def _round_up(n, m):
    return ((n + m - 1) // m) * m


# ---------------------------------------------------------------------------
# Kernel 1: collapse one embedding table against its half of the fc weight.
#   scores[0, v] = <emb[v, :], w> + bias          (TV, D) -> (1, TV)
# Lane-dense output; emb is upcast to f32 in-register (native dtype on HBM).
# ---------------------------------------------------------------------------
def _collapse_kernel(emb_ref, w_ref, b_ref, out_ref):
    emb = emb_ref[...].astype(jnp.float32)          # (TV, D)
    w = w_ref[...].astype(jnp.float32)              # (1, D)
    # (1, D) x (TV, D)^T -> (1, TV): result is naturally lane-dense.
    scores = jax.lax.dot_general(
        w, emb, (((1,), (1,)), ((), ())),
        preferred_element_type=jnp.float32)
    out_ref[...] = scores + b_ref[0, 0]


def _collapse_table(emb, w_half, bias, *, tile_v=512):
    """emb: (V, D) native dtype, w_half: (D,), bias scalar -> (1, V) f32."""
    V, D = emb.shape
    tv = V if V <= tile_v else tile_v               # tv is 512 (8/128-ok) or full
    return pl.pallas_call(
        _collapse_kernel,
        out_shape=jax.ShapeDtypeStruct((1, V), jnp.float32),
        grid=(pl.cdiv(V, tv),),
        in_specs=[
            pl.BlockSpec((tv, D), lambda i: (i, 0)),             # emb tile
            pl.BlockSpec((1, D), lambda i: (0, 0)),              # weight half
            pl.BlockSpec(memory_space=pltpu.MemorySpace.SMEM),   # bias scalar
        ],
        out_specs=pl.BlockSpec((1, tv), lambda i: (0, i)),       # lane-dense
        compiler_params=pltpu.CompilerParams(
            dimension_semantics=("parallel",)),
    )(emb, w_half.reshape(1, D).astype(jnp.float32),
      jnp.asarray(bias, jnp.float32).reshape(1, 1))


# ---------------------------------------------------------------------------
# Kernel 2: per-example score lookup + add, batch along lanes.
#   out[0, b] = cust_scores[0, cid[b]] + prod_scores[0, pid[b]]
# Lookup is a one-hot @ scores matmul so the gather rides the idle MXU.
# ---------------------------------------------------------------------------
def _expense_gather_kernel(cid_ref, pid_ref, cs_ref, ps_ref, out_ref):
    cid = cid_ref[...]                              # (1, TB) int32, batch on lanes
    pid = pid_ref[...]                              # (1, TB) int32
    cs = cs_ref[...]                                # (1, Vc) f32 (bias folded in)
    ps = ps_ref[...]                                # (1, Vp) f32
    vc = cs.shape[1]
    vp = ps.shape[1]
    tb = cid.shape[1]

    # One-hot with vocab on sublanes, batch on lanes; gather = MXU matmul.
    oh_c = (jax.lax.broadcasted_iota(jnp.int32, (vc, tb), 0)
            == cid).astype(jnp.float32)             # (Vc, TB)
    oh_p = (jax.lax.broadcasted_iota(jnp.int32, (vp, tb), 0)
            == pid).astype(jnp.float32)             # (Vp, TB)

    c_sc = jax.lax.dot_general(cs, oh_c, (((1,), (0,)), ((), ())),
                               preferred_element_type=jnp.float32)  # (1, TB)
    p_sc = jax.lax.dot_general(ps, oh_p, (((1,), (0,)), ((), ())),
                               preferred_element_type=jnp.float32)  # (1, TB)

    # Lane-dense full-tile store (bias already folded into customer scores).
    out_ref[...] = c_sc + p_sc


def expense_recommendation_forward(x, cust_emb, prod_emb, fc_w, fc_b,
                                   *, tile_b=1024, tile_v=512):
    """x: (B, 2) int [customer_id, product_id]. Returns (B, 1) float32."""
    B = x.shape[0]
    Vc, D = cust_emb.shape
    Vp = prod_emb.shape[0]

    # --- Algebraic collapse (tiled over vocab, lane-dense (1, V) outputs). --
    cust_scores = _collapse_table(cust_emb, fc_w[0, :D], fc_b[0],
                                  tile_v=tile_v)            # (1, Vc), + bias
    prod_scores = _collapse_table(prod_emb, fc_w[0, D:], 0.0,
                                  tile_v=tile_v)            # (1, Vp)

    # --- Lane-dense batch layout: wide tiles, clamped to the padded batch. --
    tb = min(tile_b, _round_up(B, 128))
    b_pad = _round_up(B, tb)
    cid = jnp.zeros((1, b_pad), jnp.int32).at[0, :B].set(x[:, 0].astype(jnp.int32))
    pid = jnp.zeros((1, b_pad), jnp.int32).at[0, :B].set(x[:, 1].astype(jnp.int32))

    out = pl.pallas_call(
        _expense_gather_kernel,
        out_shape=jax.ShapeDtypeStruct((1, b_pad), jnp.float32),
        grid=(b_pad // tb,),
        in_specs=[
            pl.BlockSpec((1, tb), lambda i: (0, i)),   # customer ids
            pl.BlockSpec((1, tb), lambda i: (0, i)),   # product ids
            pl.BlockSpec((1, Vc), lambda i: (0, 0)),   # cust scores (resident)
            pl.BlockSpec((1, Vp), lambda i: (0, 0)),   # prod scores (resident)
        ],
        out_specs=pl.BlockSpec((1, tb), lambda i: (0, i)),
        compiler_params=pltpu.CompilerParams(
            dimension_semantics=("parallel",)),
    )(cid, pid, cust_scores, prod_scores)

    # Drop batch padding and restore the PyTorch (B, 1) layout.
    return out[0, :B].reshape(B, 1)


if __name__ == "__main__":
    # Small, alignment-friendly sizes.
    num_customers = 16
    num_products = 16
    embed_dim = 32
    batch = 8

    key = jax.random.PRNGKey(0)
    k_ce, k_pe, k_w, k_b, k_xc, k_xp = jax.random.split(key, 6)

    # Deterministic synthetic parameters (shapes match nn.Embedding / nn.Linear).
    cust_emb = jax.random.normal(k_ce, (num_customers, embed_dim), jnp.float32)
    prod_emb = jax.random.normal(k_pe, (num_products, embed_dim), jnp.float32)
    fc_w = jax.random.normal(k_w, (1, 2 * embed_dim), jnp.float32) * 0.1
    fc_b = jax.random.normal(k_b, (1,), jnp.float32) * 0.1

    # Input: (B, 2) integer ids  [customer_id, product_id]
    x = jnp.stack(
        [jax.random.randint(k_xc, (batch,), 0, num_customers),
         jax.random.randint(k_xp, (batch,), 0, num_products)],
        axis=1).astype(jnp.int32)

    out = expense_recommendation_forward(x, cust_emb, prod_emb, fc_w, fc_b)
    out = jax.block_until_ready(out)

    # Pure-JAX reference check (uncollapsed PyTorch-equivalent math).
    ce = cust_emb[x[:, 0]]
    pe = prod_emb[x[:, 1]]
    ref = jnp.concatenate([ce, pe], axis=1) @ fc_w.T + fc_b
    assert out.shape == (batch, 1)
    assert jnp.allclose(out, ref, atol=1e-5), (out, ref)

    print("KERNEL_OK")
</pallas_src>

<mosaic_0001>
module attributes {stable_mosaic.version = 11 : i64} {
  func.func @_collapse_kernel(%arg0: i32, %arg1: memref<16x32xf32, #tpu.memory_space<vmem>>, %arg2: memref<1x32xf32, #tpu.memory_space<vmem>>, %arg3: memref<1x1xf32, #tpu.memory_space<smem>>, %arg4: memref<1x16xf32, #tpu.memory_space<vmem>>) attributes {dimension_semantics = [#tpu.dimension_semantics<parallel>], iteration_bounds = array<i64: 1>, scalar_prefetch = 0 : i64, scratch_operands = 0 : i64, tpu.core_type = #tpu.core_type<tc>, window_params = [{transform_indices = @transform_0, window_bounds = array<i64: 16, 32>}, {pipeline_mode = #tpu.pipeline_mode<synchronous>, transform_indices = @transform_1, window_bounds = array<i64: 1, 32>}, {transform_indices = @transform_2, window_bounds = array<i64: 1, 1>}, {transform_indices = @transform_3, window_bounds = array<i64: 1, 16>}]} {
    %c0 = arith.constant 0 : index
    %c0_0 = arith.constant 0 : index
    %0 = vector.load %arg1[%c0, %c0_0] : memref<16x32xf32, #tpu.memory_space<vmem>>, vector<16x32xf32>
    %c0_1 = arith.constant 0 : index
    %c0_2 = arith.constant 0 : index
    %1 = vector.load %arg2[%c0_1, %c0_2] : memref<1x32xf32, #tpu.memory_space<vmem>>, vector<1x32xf32>
    %cst = arith.constant dense<0.000000e+00> : vector<1x16xf32>
    %2 = tpu.matmul %1, %0, %cst {dimension_numbers = #tpu.dot_dimension_numbers<[1], [1], [0], [0], [0, 0, 1, 0], [], []>} : vector<1x32xf32>, vector<16x32xf32>, vector<1x16xf32> -> vector<1x16xf32>
    %c0_3 = arith.constant 0 : index
    %c0_4 = arith.constant 0 : index
    %3 = memref.load %arg3[%c0_3, %c0_4] : memref<1x1xf32, #tpu.memory_space<smem>>
    %4 = vector.broadcast %3 : f32 to vector<1x16xf32>
    %5 = arith.addf %2, %4 : vector<1x16xf32>
    %c0_5 = arith.constant 0 : index
    %c0_6 = arith.constant 0 : index
    %6 = vector.load %arg4[%c0_5, %c0_6] : memref<1x16xf32, #tpu.memory_space<vmem>>, vector<1x16xf32>
    tpu.vector_store %arg4[%c0_5, %c0_6], %5 {strides = array<i32>} : memref<1x16xf32, #tpu.memory_space<vmem>>, vector<1x16xf32>,
    return
  }
  func.func @transform_0(%arg0: i32) -> (i32, i32) {
    %c0_i32 = arith.constant 0 : i32
    %c0_i32_0 = arith.constant 0 : i32
    return %arg0, %c0_i32 : i32, i32
  }
  func.func @transform_1(%arg0: i32) -> (i32, i32) {
    %c0_i32 = arith.constant 0 : i32
    %c0_i32_0 = arith.constant 0 : i32
    %c0_i32_1 = arith.constant 0 : i32
    return %c0_i32, %c0_i32_0 : i32, i32
  }
  func.func @transform_2(%arg0: i32) -> (i32, i32) {
    %c0_i32 = arith.constant 0 : i32
    %c0_i32_0 = arith.constant 0 : i32
    %c0_i32_1 = arith.constant 0 : i32
    return %c0_i32, %c0_i32_0 : i32, i32
  }
  func.func @transform_3(%arg0: i32) -> (i32, i32) {
    %c0_i32 = arith.constant 0 : i32
    %c0_i32_0 = arith.constant 0 : i32
    return %c0_i32, %arg0 : i32, i32
  }
}

</mosaic_0001>

<llo_original>
// kernel: tpu_custom_call.1
$region0: #{tpu_custom_call.1}
  #allocation0 [shape = 'u32[]', space=smem, size = 0x4, offset = 0x4, fixed_abs, tag = 'smem constant byte address 0x4 - core index']
  #allocation1 [shape = 'u32[144,128]{1,0:T(1,128)}', space=vmem, size = 0x12000, scoped, tag = 'internal scratch']
  #allocation2 [shape = 'f32[1,1]{1,0:T(1,128)S(6)}', space=smem, size = 0x200, scoped, tag = 'scoped memory for tpu_custom_call.1']
  %s0 = inlined_call_operand.hbm [shape: f32[16,32], index: 0, kind: input, shape index: {}]
  %s1 = inlined_call_operand.vmem [shape: f32[1,32], index: 1, kind: input, shape index: {}]
  %s2 = inlined_call_operand.<no memory space> [shape: f32[1,1], index: 2, kind: input, shape index: {}]
  %s3 = inlined_call_operand.hbm [shape: f32[1,16], index: 3, kind: output, shape index: {}]
  %s4 = sld [smem:[#allocation0]]
  $region26: #{tpu_custom_call.1} parent=0
    _
  %s6 = ssub.s32 1, %s4
  %s7 = scalar_select 0, %s6, %s4
  %8 = sst [smem:[#allocation2]] %s2
  $region1: #{tpu_custom_call.1} parent=0
    #allocation3 [shape = 'u8[8192]{0}', space=vmem, size = 0x2000, scoped, tag = 'input window, operand 0, single buffered']
    #allocation4 [shape = 's32[1]{0}', space=sflag, size = 0x4, scoped, tag = 'scoped memory for tpu_custom_call.1']
    #allocation5 [shape = 's32[1]{0}', space=sflag, size = 0x4, scoped, tag = 'scoped memory for tpu_custom_call.1']
    #allocation6 [shape = 'u8[512]{0}', space=vmem, size = 0x400, scoped, tag = 'output window, operand 0, single buffered']
    %9 = vsyncpa [#allocation4], 0
    %10 = vsyncpa [#allocation5], 0
    // Predicated region
    $region2: #{tpu_custom_call.1} parent=1 // pred_check
      _
    $region3: #{tpu_custom_call.1} parent=1 // pred_check_branch
      %12 = sbr.rel (0) target = $region5
    $region4: #{tpu_custom_call.1} parent=1 // pred_region
      %s14 = ssub.s32 256, 256
      %15 = vsyncadd [#allocation4], %s14
      %s16 = sshll.u32 [#allocation3], 4
      %s17 = int_to_ptr.vmem [resolvable:$true] %s16
      %22 = dma.hbm_to_vmem [thread:$0]  %s0, 256, %s17, [#allocation4], 128, 128, 8
    $region5: #{tpu_custom_call.1} parent=1 // pred_fallthru
      _
    // Predicated region
    $region6: #{tpu_custom_call.1} parent=1 // pred_check
      _
    $region7: #{tpu_custom_call.1} parent=1 // pred_check_branch
      %24 = sbr.rel (0) target = $region9
    $region8: #{tpu_custom_call.1} parent=1 // pred_region
      _
    $region9: #{tpu_custom_call.1} parent=1 // pred_fallthru
      _
    // Predicated region
    $region10: #{tpu_custom_call.1} parent=1 // pred_check
      _
    $region11: #{tpu_custom_call.1} parent=1 // pred_check_branch
      %26 = sbr.rel (0) target = $region13
    $region12: #{tpu_custom_call.1} parent=1 // pred_region
      _
    $region13: #{tpu_custom_call.1} parent=1 // pred_fallthru
      _
    // Predicated region
    $region14: #{tpu_custom_call.1} parent=1 // pred_check
      _
    $region15: #{tpu_custom_call.1} parent=1 // pred_check_branch
      %28 = sbr.rel (0) target = $region17
    $region16: #{tpu_custom_call.1} parent=1 // pred_region
      %29 = dma.done [#allocation4], 256
    $region17: #{tpu_custom_call.1} parent=1 // pred_fallthru
      _
    %v30 = vld [vmem:[#allocation3] sm:$0xff]
    %v31 = vld [vmem:[#allocation3 + $0x8] sm:$0xff]
    %v32 = vld [vmem:[%s1] sm:$0x1]
    %s33 = sld [smem:[#allocation2]]
    %v34 = vstv %s33
    %vm35 = vcmask 261120
    %v37 = vsel %vm35, %v32, 0
    %v40 = vsel %vm35, %v30, 0
    %v43 = vsel %vm35, %v31, 0
    %45 = vmatprep.subr.mxu0 0.0
    %46 = vmatpush1.xpose.msra.mxu0 %v40
    %47 = vmatprep.subr.mxu0 0.0
    %48 = vmatpush1.xpose.msra.mxu0 %v43
    %49 = vmatprep.subr.mxu0 0.0
    %50 = vmatpush1.xpose.msra.mxu0 0.0
    %51 = vmatprep.subr.mxu0 0.0
    %52 = vmatpush1.xpose.msra.mxu0 0.0
    %53 = vmatprep.subr.mxu0 0.0
    %54 = vmatpush1.xpose.msra.mxu0 0.0
    %55 = vmatprep.subr.mxu0 0.0
    %56 = vmatpush1.xpose.msra.mxu0 0.0
    %57 = vmatprep.subr.mxu0 0.0
    %58 = vmatpush1.xpose.msra.mxu0 0.0
    %59 = vmatprep.subr.mxu0 0.0
    %60 = vmatpush1.xpose.msra.mxu0 0.0
    %61 = vmatprep.subr.mxu0 0.0
    %62 = vmatpush1.xpose.msra.mxu0 0.0
    %63 = vmatprep.subr.mxu0 0.0
    %64 = vmatpush1.xpose.msra.mxu0 0.0
    %65 = vmatprep.subr.mxu0 0.0
    %66 = vmatpush1.xpose.msra.mxu0 0.0
    %67 = vmatprep.subr.mxu0 0.0
    %68 = vmatpush1.xpose.msra.mxu0 0.0
    %69 = vmatprep.subr.mxu0 0.0
    %70 = vmatpush1.xpose.msra.mxu0 0.0
    %71 = vmatprep.subr.mxu0 0.0
    %72 = vmatpush1.xpose.msra.mxu0 0.0
    %73 = vmatprep.subr.mxu0 0.0
    %74 = vmatpush1.xpose.msra.mxu0 0.0
    %75 = vmatprep.subr.mxu0 0.0
    %76 = vmatpush1.xpose.msra.mxu0 0.0
    %77 = vmatprep.subr.mxu0 0.0
    %78 = vmatpush1.xpose.msra.mxu0 0.0
    %79 = vmatprep.subr.mxu0 0.0
    %80 = vmatpush1.xpose.msra.mxu0 0.0
    %81 = vmatprep.subr.mxu0 0.0
    %82 = vmatpush1.xpose.msra.mxu0 0.0
    %83 = vmatprep.subr.mxu0 0.0
    %84 = vmatpush1.xpose.msra.mxu0 0.0
    %85 = vmatprep.subr.mxu0 0.0
    %86 = vmatpush1.xpose.msra.mxu0 0.0
    %87 = vmatprep.subr.mxu0 0.0
    %88 = vmatpush1.xpose.msra.mxu0 0.0
    %89 = vmatprep.subr.mxu0 0.0
    %90 = vmatpush1.xpose.msra.mxu0 0.0
    %91 = vmatprep.subr.mxu0 0.0
    %92 = vmatpush1.xpose.msra.mxu0 0.0
    %93 = vmatprep.subr.mxu0 0.0
    %94 = vmatpush1.xpose.msra.mxu0 0.0
    %95 = vmatprep.subr.mxu0 0.0
    %96 = vmatpush1.xpose.msra.mxu0 0.0
    %97 = vmatprep.subr.mxu0 0.0
    %98 = vmatpush1.xpose.msra.mxu0 0.0
    %99 = vmatprep.subr.mxu0 0.0
    %100 = vmatpush1.xpose.msra.mxu0 0.0
    %101 = vmatprep.subr.mxu0 0.0
    %102 = vmatpush1.xpose.msra.mxu0 0.0
    %103 = vmatprep.subr.mxu0 0.0
    %104 = vmatpush1.xpose.msra.mxu0 0.0
    %105 = vmatprep.subr.mxu0 0.0
    %106 = vmatpush1.xpose.msra.mxu0 0.0
    %107 = vmatprep.subr.mxu0 0.0
    %108 = vmatpush1.xpose.msra.mxu0 0.0
    %109 = vmatprep.mubr.f32.mxu0 0.0
    %110 = vmatmul.mubr.f32.gmra.mrb[0].mxu0 %v37
    %v111 = vpop.f32.mrb[0].mxu0
    %v112 = vadd.f32 %v34, %v111
    %v113 = vpop.f32.mrb[0].mxu0
    %114 = vdwg.mxu0
    %vm115 = vcmask 122880
    %116 = vst.msk [vmem:[#allocation6] sm:$0x1] %vm115, %v112
    // Predicated region
    $region18: #{tpu_custom_call.1} parent=1 // pred_check
      _
    $region19: #{tpu_custom_call.1} parent=1 // pred_check_branch
      %118 = sbr.rel (0) target = $region21
    $region20: #{tpu_custom_call.1} parent=1 // pred_region
      %s120 = ssub.s32 16, 16
      %121 = vsyncadd [#allocation5], %s120
      %s123 = sshll.u32 [#allocation6], 4
      %s124 = int_to_ptr.vmem [resolvable:$true] %s123
      %126 = dma.vmem_to_hbm [thread:$0]  %s124, 16, %s3, [#allocation5]
    $region21: #{tpu_custom_call.1} parent=1 // pred_fallthru
      _
    // Predicated region
    $region22: #{tpu_custom_call.1} parent=1 // pred_check
      _
    $region23: #{tpu_custom_call.1} parent=1 // pred_check_branch
      %128 = sbr.rel (0) target = $region25
    $region24: #{tpu_custom_call.1} parent=1 // pred_region
      %129 = dma.done [#allocation5], 16
    $region25: #{tpu_custom_call.1} parent=1 // pred_fallthru
      _
    %130 = vsyncpa [#allocation4], 1
    %131 = vsyncpa [#allocation5], 1

</llo_original>
